<compile_context>
chip_gen: v7x
topology: tpu7x:2x2x1
jax: 0.10.0
libtpu: 0.0.40
codegen_flags: <defaults>
</compile_context>

<pallas_src>
import numpy as np
import jax
import jax.numpy as jnp
from jax.experimental import pallas as pl
from jax.experimental.pallas import tpu as pltpu


def make_positional_encoding_table(d_model: int, max_len: int) -> jnp.ndarray:
    """Deterministic buffer construction, mirrors the PyTorch __init__ (float32)."""
    assert d_model % 2 == 0, "d_model must be even (same constraint as the PyTorch module)"
    position = np.arange(max_len, dtype=np.float32)[:, None]                 # (max_len, 1)
    div_term = np.exp(np.arange(0, d_model, 2, dtype=np.float32)
                      * (-np.log(10000.0) / d_model))                        # (d_model//2,)
    pe = np.zeros((max_len, d_model), dtype=np.float32)
    pe[:, 0::2] = np.sin(position * div_term)
    pe[:, 1::2] = np.cos(position * div_term)
    return jnp.asarray(pe)


def _pe_add_kernel(x_ref, pe_ref, o_ref):
    # x_ref/o_ref: (Sblk, Bblk, D); pe_ref: (Sblk, 1, D).
    # Broadcast along the sublane (batch) axis only -- no widened temporary.
    o_ref[...] = (x_ref[...] + pe_ref[...]).astype(o_ref.dtype)


def _round_up(x: int, m: int) -> int:
    return ((x + m - 1) // m) * m


def _divisors(n: int):
    out = set()
    i = 1
    while i * i <= n:
        if n % i == 0:
            out.add(i)
            out.add(n // i)
        i += 1
    return sorted(out)


def _choose_blocks(S: int, B: int, D: int, x_itemsize: int, out_itemsize: int,
                   target_block_bytes: int):
    """Pick (seq_block, batch_block).

    - batch_block must be B itself or a multiple-of-8 divisor of B (sublane rule);
      it is shrunk when a single seq-row of the block would blow the byte budget.
    - seq_block is the largest divisor of S whose x-block stays <= target bytes,
      subject to the total grid having >= 2 steps on splittable problems (v7x 2 TCs).
    """
    elem_bytes = max(x_itemsize, out_itemsize)

    legal_b = sorted({B} | {d for d in _divisors(B) if d % 8 == 0}, reverse=True)
    batch_block = legal_b[-1]                      # smallest legal as a fallback
    for bb in legal_b:                             # prefer the largest that fits
        if bb * D * elem_bytes <= target_block_bytes:
            batch_block = bb
            break

    row_bytes = batch_block * D * elem_bytes
    max_rows = max(1, target_block_bytes // row_bytes)
    n_batch_steps = B // batch_block

    seq_block = 1                                  # always legal; never OOMs
    for d in _divisors(S):
        if d > max_rows:
            continue
        if S > 1 and n_batch_steps * (S // d) < 2:
            # would collapse to a single-step grid -> one idle TC on v7x
            continue
        seq_block = max(seq_block, d)
    return seq_block, batch_block


def positional_encoding_forward(x: jnp.ndarray, pe: jnp.ndarray, *,
                                seq_block: int | None = None,
                                batch_block: int | None = None,
                                target_block_bytes: int = 4 << 20,
                                donate_x: bool = False) -> jnp.ndarray:
    """x: (S, B, D); pe: (max_len, D) float32 buffer.  Returns x + pe[:S, None, :]."""
    S, B, D = x.shape
    assert pe.shape[0] >= S and pe.shape[1] == D

    # PyTorch promotion semantics: adding the f32 buffer promotes bf16/f16 x to f32.
    out_dtype = jnp.result_type(x.dtype, pe.dtype)

    # Glue outside the hot path: static slice + singleton batch axis (no dtype cast).
    pe3 = pe[:S][:, None, :]                                        # (S, 1, D)

    auto_sb, auto_bb = _choose_blocks(S, B, D, x.dtype.itemsize,
                                      jnp.dtype(out_dtype).itemsize,
                                      target_block_bytes)
    if seq_block is None:
        seq_block = auto_sb
    if batch_block is None:
        batch_block = auto_bb
    assert S % seq_block == 0, "seq_block must divide S"
    assert B % batch_block == 0, "batch_block must divide B"
    assert batch_block == B or batch_block % 8 == 0, "sublane block must be 8-aligned or full"

    grid = (S // seq_block, B // batch_block)

    # Double-buffered VMEM working set, padded to the (8,128) tile, plus headroom.
    pad_b = _round_up(batch_block, 8)
    pad_d = _round_up(D, 128)
    x_blk = seq_block * pad_b * pad_d * x.dtype.itemsize
    o_blk = seq_block * pad_b * pad_d * jnp.dtype(out_dtype).itemsize
    pe_blk = seq_block * 8 * pad_d * pe.dtype.itemsize
    vmem_limit = int(max(16 << 20, 2 * (x_blk + o_blk + pe_blk) + (4 << 20)))

    aliases = {}
    if donate_x:
        # Aliasing is only valid when dtypes match, and the caller must not reuse x.
        assert out_dtype == x.dtype, "donate_x requires the output dtype to equal x.dtype"
        aliases = {0: 0}

    out = pl.pallas_call(
        _pe_add_kernel,
        out_shape=jax.ShapeDtypeStruct((S, B, D), out_dtype),
        grid_spec=pltpu.PrefetchScalarGridSpec(
            num_scalar_prefetch=0,
            grid=grid,
            in_specs=[
                # x: (seq_block, batch_block, D) block streamed along S and B.
                pl.BlockSpec((seq_block, batch_block, D), lambda s, b: (s, b, 0)),
                # pe: tiny (seq_block, 1, D) tile, constant along the batch grid axis;
                # HBM traffic stays dominated by x-read + out-write only.
                pl.BlockSpec((seq_block, 1, D), lambda s, b: (s, 0, 0)),
            ],
            out_specs=pl.BlockSpec((seq_block, batch_block, D), lambda s, b: (s, b, 0)),
        ),
        compiler_params=pltpu.CompilerParams(
            dimension_semantics=("parallel", "parallel"),
            vmem_limit_bytes=vmem_limit,
        ),
        input_output_aliases=aliases,
    )(x, pe3)

    return out


if __name__ == "__main__":
    # Small shapes consistent with the module: seq=8, batch=2, d_model=32, max_len=16.
    S, B, D, MAX_LEN = 8, 2, 32, 16

    key = jax.random.PRNGKey(0)
    x = jax.random.normal(key, (S, B, D), dtype=jnp.float32)

    pe = make_positional_encoding_table(d_model=D, max_len=MAX_LEN)

    out = positional_encoding_forward(x, pe)
    out = jax.block_until_ready(out)

    # Reference check (plain JAX, same semantics as the PyTorch forward).
    ref = x + pe[:S][:, None, :]
    np.testing.assert_allclose(np.asarray(out), np.asarray(ref), rtol=1e-6, atol=1e-6)

    print("KERNEL_OK")
</pallas_src>

<mosaic_0001>
module attributes {stable_mosaic.version = 11 : i64} {
  func.func @_pe_add_kernel(%arg0: i32, %arg1: i32, %arg2: memref<4x2x32xf32, #tpu.memory_space<vmem>>, %arg3: memref<4x1x32xf32, #tpu.memory_space<vmem>>, %arg4: memref<4x2x32xf32, #tpu.memory_space<vmem>>) attributes {dimension_semantics = [#tpu.dimension_semantics<parallel>, #tpu.dimension_semantics<parallel>], iteration_bounds = array<i64: 2, 1>, scalar_prefetch = 0 : i64, scratch_operands = 0 : i64, tpu.core_type = #tpu.core_type<tc>, window_params = [{transform_indices = @transform_0, window_bounds = array<i64: 4, 2, 32>}, {transform_indices = @transform_1, window_bounds = array<i64: 4, 1, 32>}, {transform_indices = @transform_2, window_bounds = array<i64: 4, 2, 32>}]} {
    %c0 = arith.constant 0 : index
    %c0_0 = arith.constant 0 : index
    %c0_1 = arith.constant 0 : index
    %0 = vector.load %arg2[%c0, %c0_0, %c0_1] : memref<4x2x32xf32, #tpu.memory_space<vmem>>, vector<4x2x32xf32>
    %c0_2 = arith.constant 0 : index
    %c0_3 = arith.constant 0 : index
    %c0_4 = arith.constant 0 : index
    %1 = vector.load %arg3[%c0_2, %c0_3, %c0_4] : memref<4x1x32xf32, #tpu.memory_space<vmem>>, vector<4x1x32xf32>
    %2 = vector.broadcast %1 : vector<4x1x32xf32> to vector<4x2x32xf32>
    %3 = arith.addf %0, %2 : vector<4x2x32xf32>
    %c0_5 = arith.constant 0 : index
    %c0_6 = arith.constant 0 : index
    %c0_7 = arith.constant 0 : index
    %4 = vector.load %arg4[%c0_5, %c0_6, %c0_7] : memref<4x2x32xf32, #tpu.memory_space<vmem>>, vector<4x2x32xf32>
    tpu.vector_store %arg4[%c0_5, %c0_6, %c0_7], %3 {strides = array<i32>} : memref<4x2x32xf32, #tpu.memory_space<vmem>>, vector<4x2x32xf32>,
    return
  }
  func.func @transform_0(%arg0: i32, %arg1: i32) -> (i32, i32, i32) {
    %c0_i32 = arith.constant 0 : i32
    %c0_i32_0 = arith.constant 0 : i32
    return %arg0, %arg1, %c0_i32 : i32, i32, i32
  }
  func.func @transform_1(%arg0: i32, %arg1: i32) -> (i32, i32, i32) {
    %c0_i32 = arith.constant 0 : i32
    %c0_i32_0 = arith.constant 0 : i32
    %c0_i32_1 = arith.constant 0 : i32
    return %arg0, %c0_i32, %c0_i32_0 : i32, i32, i32
  }
  func.func @transform_2(%arg0: i32, %arg1: i32) -> (i32, i32, i32) {
    %c0_i32 = arith.constant 0 : i32
    %c0_i32_0 = arith.constant 0 : i32
    return %arg0, %arg1, %c0_i32 : i32, i32, i32
  }
}

</mosaic_0001>

<llo_original>
// kernel: tpu_custom_call.1
$region0: #{tpu_custom_call.1}
  #allocation0 [shape = 'u32[]', space=smem, size = 0x4, offset = 0x4, fixed_abs, tag = 'smem constant byte address 0x4 - core index']
  #allocation1 [shape = 'u32[144,128]{1,0:T(1,128)}', space=vmem, size = 0x12000, scoped, tag = 'internal scratch']
  %s0 = inlined_call_operand.hbm [shape: f32[8,2,32], index: 0, kind: input, shape index: {}]
  %s1 = inlined_call_operand.hbm [shape: f32[8,1,32], index: 1, kind: input, shape index: {}]
  %s2 = inlined_call_operand.hbm [shape: f32[8,2,32], index: 2, kind: output, shape index: {}]
  %s3 = sld [smem:[#allocation0]]
  $region49: #{tpu_custom_call.1} parent=0
    _
  %s5 = ssub.s32 1, %s3
  %s6 = scalar_select 0, %s5, %s3
  $region1: #{tpu_custom_call.1} parent=0
    #allocation2 [shape = 'u8[8192]{0}', space=vmem, size = 0x2000, scoped, tag = 'input window, operand 0']
    #allocation3 [shape = 's32[2]{0}', space=sflag, size = 0x8, scoped, tag = 'scoped memory for tpu_custom_call.1']
    #allocation4 [shape = 's32[2]{0}', space=sflag, size = 0x8, scoped, tag = 'scoped memory for tpu_custom_call.1']
    #allocation5 [shape = 'u8[4096]{0}', space=vmem, size = 0x1000, scoped, tag = 'input window, operand 1']
    #allocation6 [shape = 's32[2]{0}', space=sflag, size = 0x8, scoped, tag = 'scoped memory for tpu_custom_call.1']
    #allocation7 [shape = 'u8[8192]{0}', space=vmem, size = 0x2000, scoped, tag = 'output window, operand 0']
    %7 = vsyncpa [#allocation3], 0
    %s8 = scalar_lea.sflag [#allocation3], 1
    %9 = vsyncpa %s8, 0
    %10 = vsyncpa [#allocation6], 0
    %s11 = scalar_lea.sflag [#allocation6], 1
    %12 = vsyncpa %s11, 0
    %13 = vsyncpa [#allocation4], 0
    %s14 = scalar_lea.sflag [#allocation4], 1
    %15 = vsyncpa %s14, 0
    loop: start=0, step=1, limit=4
    $region2: #{tpu_custom_call.1} parent=1 // loop_pre_header
      _
    $region3: #{tpu_custom_call.1} parent=1 // loop_header
      %s17 = sphi 0, %s21
      %p18 = scmp.ge.s32.totalorder %s17, 4
      %s24 = sphi 0, %s36
      %s25 = sphi 0, %s32
      %s26 = sphi 0, %s24
      %s27 = sphi 0, %s25
      %s28 = sphi 0, %s26
      %s29 = sphi 0, %s27
      %s41 = sphi 0, %s43
      %s44 = sphi 0, %s41
      %s45 = sphi 0, %s44
      %s61 = sphi 0, %s45
      %s67 = sphi 0, %s69
      %s70 = sphi 0, %s67
      %s71 = sphi 0, %s70
      %s87 = sphi 0, %s71
      %s95 = sphi 0, %s97
      %s98 = sphi 0, %s95
      %s99 = sphi 0, %s98
      %s115 = sphi 0, %s99
    $region4: #{tpu_custom_call.1} parent=1 // loop_header_branch
      %20 = sbr.rel (%p18) target = $region8
    $region5: #{tpu_custom_call.1} parent=1 // loop_body
      %s22 = ssub.s32 %s17, 1
      %s23 = ssub.s32 %s17, 2
      %s30 = sadd.s32 1, %s25
      %p31 = scmp.ge.s32.totalorder %s30, 1
      %s32 = scalar_select %p31, 0, %s30
      %s33 = sadd.s32 1, %s24
      %s34 = scalar_select %p31, %s33, %s24
      %p35 = scmp.ge.s32.totalorder %s34, 2
      %s36 = scalar_select %p35, 0, %s34
      %s37 = ssub.s32 %s24, %s36
      %s38 = ssub.s32 %s25, %s32
      %s39 = sor.u32 %s37, %s38
      %p40 = scmp.eq.s32.totalorder %s39, 0
      %s42 = sadd.s32 %s41, 1
      %s43 = scalar_select %p40, %s41, %s42
      %p46 = pneg %p40
      %p47 = scmp.eq.s32.totalorder %s17, 1
      %p48 = por %p46, %p47
      %p49 = scmp.ne.s32.totalorder %s41, %s44
      %p50 = scmp.eq.s32.totalorder %s17, 0
      %p51 = por %p49, %p50
      %p52 = scmp.ne.s32.totalorder %s41, %s44
      %p53 = scmp.eq.s32.totalorder %s22, 1
      %p54 = por %p52, %p53
      %p55 = scmp.ne.s32.totalorder %s44, %s45
      %p56 = scmp.eq.s32.totalorder %s22, 0
      %p57 = por %p55, %p56
      %p58 = scmp.ne.s32.totalorder %s44, %s45
      %p59 = scmp.eq.s32.totalorder %s23, 1
      %p60 = por %p58, %p59
      %p62 = scmp.ne.s32.totalorder %s45, %s61
      %p63 = scmp.eq.s32.totalorder %s23, 0
      %p64 = por %p62, %p63
      %s65 = ssub.s32 %s24, %s36
      %p66 = scmp.eq.s32.totalorder %s65, 0
      %s68 = sadd.s32 %s67, 1
      %s69 = scalar_select %p66, %s67, %s68
      %p72 = pneg %p66
      %p73 = scmp.eq.s32.totalorder %s17, 1
      %p74 = por %p72, %p73
      %p75 = scmp.ne.s32.totalorder %s67, %s70
      %p76 = scmp.eq.s32.totalorder %s17, 0
      %p77 = por %p75, %p76
      %p78 = scmp.ne.s32.totalorder %s67, %s70
      %p79 = scmp.eq.s32.totalorder %s22, 1
      %p80 = por %p78, %p79
      %p81 = scmp.ne.s32.totalorder %s70, %s71
      %p82 = scmp.eq.s32.totalorder %s22, 0
      %p83 = por %p81, %p82
      %p84 = scmp.ne.s32.totalorder %s70, %s71
      %p85 = scmp.eq.s32.totalorder %s23, 1
      %p86 = por %p84, %p85
      %p88 = scmp.ne.s32.totalorder %s71, %s87
      %p89 = scmp.eq.s32.totalorder %s23, 0
      %p90 = por %p88, %p89
      %s91 = ssub.s32 %s24, %s36
      %s92 = ssub.s32 %s25, %s32
      %s93 = sor.u32 %s91, %s92
      %p94 = scmp.eq.s32.totalorder %s93, 0
      %s96 = sadd.s32 %s95, 1
      %s97 = scalar_select %p94, %s95, %s96
      %p100 = pneg %p94
      %p101 = scmp.eq.s32.totalorder %s17, 1
      %p102 = por %p100, %p101
      %p103 = scmp.ne.s32.totalorder %s95, %s98
      %p104 = scmp.eq.s32.totalorder %s17, 0
      %p105 = por %p103, %p104
      %p106 = scmp.ne.s32.totalorder %s95, %s98
      %p107 = scmp.eq.s32.totalorder %s22, 1
      %p108 = por %p106, %p107
      %p109 = scmp.ne.s32.totalorder %s98, %s99
      %p110 = scmp.eq.s32.totalorder %s22, 0
      %p111 = por %p109, %p110
      %p112 = scmp.ne.s32.totalorder %s98, %s99
      %p113 = scmp.eq.s32.totalorder %s23, 1
      %p114 = por %p112, %p113
      %p116 = scmp.ne.s32.totalorder %s99, %s115
      %p117 = scmp.eq.s32.totalorder %s23, 0
      %p118 = por %p116, %p117
      %p119 = scmp.le.s32.totalorder 1, %s17
      %p120 = scmp.lt.s32.totalorder %s17, 3
      %p121 = pnand %p119, %p120
      %p122 = pneg %p121
      // Predicated region
      $region9: #{tpu_custom_call.1} parent=5 // pred_check
        _
      $region10: #{tpu_custom_call.1} parent=5 // pred_check_branch
        %124 = sbr.rel (%p121) target = $region12
      $region11: #{tpu_custom_call.1} parent=5 // pred_region
        %s125 = ssub.s32 %s17, 1
      $region12: #{tpu_custom_call.1} parent=5 // pred_fallthru
        _
      %p126 = scmp.lt.s32.totalorder %s17, 2
      // Predicated region
      $region13: #{tpu_custom_call.1} parent=5 // pred_check
        %p127 = pneg %p126
      $region14: #{tpu_custom_call.1} parent=5 // pred_check_branch
        %129 = sbr.rel (%p127) target = $region16
      $region15: #{tpu_custom_call.1} parent=5 // pred_region
        // Predicated region
        $region17: #{tpu_custom_call.1} parent=15 // pred_check
          %p130 = pneg %p51
        $region18: #{tpu_custom_call.1} parent=15 // pred_check_branch
          %132 = sbr.rel (%p130) target = $region20
        $region19: #{tpu_custom_call.1} parent=15 // pred_region
          %s133 = sand.u32 %s41, 1
          %s134 = scalar_lea.sflag [#allocation3], %s133
          %s135 = sand.u32 %s41, 1
          %s136 = smul.addr %s135, 8
          %s137 = scalar_lea.vmem [#allocation2], %s136
          %s138 = smul.u32 4, %s24
          %s140 = ssub.s32 128, 128
          %141 = vsyncadd %s134, %s140
          %s142 = sadd.s32 %s25, %s138
          %s143 = smul.addr %s142, 32
          %s144 = scalar_lea.hbm %s0, %s143
          %s145 = sshll.u32 %s137, 4
          %s146 = int_to_ptr.vmem [resolvable:$true] %s145
          %151 = dma.hbm_to_vmem [thread:$0]  %s144, 128, %s146, %s134, 32, 32, 2
        $region20: #{tpu_custom_call.1} parent=15 // pred_fallthru
          _
        // Predicated region
        $region21: #{tpu_custom_call.1} parent=15 // pred_check
          %p152 = pneg %p77
        $region22: #{tpu_custom_call.1} parent=15 // pred_check_branch
          %154 = sbr.rel (%p152) target = $region24
        $region23: #{tpu_custom_call.1} parent=15 // pred_region
          %s155 = sand.u32 %s67, 1
          %s156 = scalar_lea.sflag [#allocation6], %s155
          %s157 = sand.u32 %s67, 1
          %s158 = smul.addr %s157, 4
          %s159 = scalar_lea.vmem [#allocation5], %s158
          %s160 = smul.u32 4, %s24
          %s162 = ssub.s32 64, 64
          %163 = vsyncadd %s156, %s162
          %s164 = smul.addr %s160, 16
          %s165 = scalar_lea.hbm %s1, %s164
          %s166 = sshll.u32 %s159, 4
          %s167 = int_to_ptr.vmem [resolvable:$true] %s166
          %172 = dma.hbm_to_vmem [thread:$0]  %s165, 64, %s167, %s156, 16, 16, 1
        $region24: #{tpu_custom_call.1} parent=15 // pred_fallthru
          _
      $region16: #{tpu_custom_call.1} parent=5 // pred_fallthru
        _
      %p173 = scmp.le.s32.totalorder 1, %s17
      %p174 = scmp.lt.s32.totalorder %s17, 3
      %p175 = pnand %p173, %p174
      %p176 = pneg %p175
      // Predicated region
      $region25: #{tpu_custom_call.1} parent=5 // pred_check
        _
      $region26: #{tpu_custom_call.1} parent=5 // pred_check_branch
        %178 = sbr.rel (%p175) target = $region28
      $region27: #{tpu_custom_call.1} parent=5 // pred_region
        %s179 = ssub.s32 %s17, 1
        %s180 = sand.u32 %s44, 1
        %s181 = scalar_lea.sflag [#allocation3], %s180
        %s182 = sand.u32 %s44, 1
        %s183 = smul.addr %s182, 8
        %s184 = scalar_lea.vmem [#allocation2], %s183
        // Predicated region
        $region29: #{tpu_custom_call.1} parent=27 // pred_check
          %p185 = pneg %p57
        $region30: #{tpu_custom_call.1} parent=27 // pred_check_branch
          %187 = sbr.rel (%p185) target = $region32
        $region31: #{tpu_custom_call.1} parent=27 // pred_region
          %188 = dma.done %s181, 128
        $region32: #{tpu_custom_call.1} parent=27 // pred_fallthru
          _
        %s189 = sand.u32 %s70, 1
        %s190 = scalar_lea.sflag [#allocation6], %s189
        %s191 = sand.u32 %s70, 1
        %s192 = smul.addr %s191, 4
        %s193 = scalar_lea.vmem [#allocation5], %s192
        // Predicated region
        $region33: #{tpu_custom_call.1} parent=27 // pred_check
          %p194 = pneg %p83
        $region34: #{tpu_custom_call.1} parent=27 // pred_check_branch
          %196 = sbr.rel (%p194) target = $region36
        $region35: #{tpu_custom_call.1} parent=27 // pred_region
          %197 = dma.done %s190, 64
        $region36: #{tpu_custom_call.1} parent=27 // pred_fallthru
          _
        %s198 = sand.u32 %s44, 1
        %s199 = scalar_lea.sflag [#allocation3], %s198
        %s200 = sand.u32 %s44, 1
        %s201 = smul.addr %s200, 8
        %s202 = scalar_lea.vmem [#allocation2], %s201
        %p203 = pneg %p57
        %p204 = pneg %p54
        %s205 = sand.u32 %s70, 1
        %s206 = scalar_lea.sflag [#allocation6], %s205
        %s207 = sand.u32 %s70, 1
        %s208 = smul.addr %s207, 4
        %s209 = scalar_lea.vmem [#allocation5], %s208
        %p210 = pneg %p83
        %p211 = pneg %p80
        %p212 = pneg %p111
        %p213 = pneg %p108
        %s214 = sand.u32 %s98, 1
        %s215 = scalar_lea.sflag [#allocation4], %s214
        %s216 = sand.u32 %s98, 1
        %s217 = smul.addr %s216, 8
        %s218 = scalar_lea.vmem [#allocation7], %s217
        %s219 = smul.u32 4, %s26
        %s220 = smul.u32 4, %s26
        %s221 = smul.u32 4, %s26
        %v222 = vld [vmem:[%s184] sm:$0x3]
        %v223 = vld [vmem:[%s184 + $0x2] sm:$0x3]
        %v224 = vld [vmem:[%s184 + $0x4] sm:$0x3]
        %v225 = vld [vmem:[%s184 + $0x6] sm:$0x3]
        %v226 = vld [vmem:[%s193] sm:$0x1]
        %v227 = vld [vmem:[%s193 + $0x1] sm:$0x1]
        %v228 = vld [vmem:[%s193 + $0x2] sm:$0x1]
        %v229 = vld [vmem:[%s193 + $0x3] sm:$0x1]
        %v234 = vlaneseq
        %v235 = vshrl.u32 %v234, 7
        %v236 = vsub.s32 0, %v235
        %v237 = vrot.slane %v226, %v236
        %v238 = vlaneseq
        %v239 = vshrl.u32 %v238, 7
        %v240 = vsub.s32 0, %v239
        %v241 = vrot.slane %v227, %v240
        %v242 = vlaneseq
        %v243 = vshrl.u32 %v242, 7
        %v244 = vsub.s32 0, %v243
        %v245 = vrot.slane %v228, %v244
        %v246 = vlaneseq
        %v247 = vshrl.u32 %v246, 7
        %v248 = vsub.s32 0, %v247
        %v249 = vrot.slane %v229, %v248
        %v254 = vadd.f32 %v222, %v237
        %v255 = vadd.f32 %v223, %v241
        %v256 = vadd.f32 %v224, %v245
        %v257 = vadd.f32 %v225, %v249
        %vm258 = vcmask 254976
        %259 = vst.msk [vmem:[%s218] sm:$0x3] %vm258, %v254
        %260 = vst.msk [vmem:[%s218 + $0x2] sm:$0x3] %vm258, %v255
        %261 = vst.msk [vmem:[%s218 + $0x4] sm:$0x3] %vm258, %v256
        %262 = vst.msk [vmem:[%s218 + $0x6] sm:$0x3] %vm258, %v257
        %s263 = sand.u32 %s98, 1
        %s264 = scalar_lea.sflag [#allocation4], %s263
        %s265 = sand.u32 %s98, 1
        %s266 = smul.addr %s265, 8
        %s267 = scalar_lea.vmem [#allocation7], %s266
        // Predicated region
        $region37: #{tpu_custom_call.1} parent=27 // pred_check
          %p268 = pneg %p108
        $region38: #{tpu_custom_call.1} parent=27 // pred_check_branch
          %270 = sbr.rel (%p268) target = $region40
        $region39: #{tpu_custom_call.1} parent=27 // pred_region
          %s271 = smul.u32 4, %s26
          %s273 = ssub.s32 128, 128
          %274 = vsyncadd %s264, %s273
          %s275 = sadd.s32 %s27, %s271
          %s276 = smul.addr %s275, 32
          %s277 = scalar_lea.hbm %s2, %s276
          %s278 = sshll.u32 %s267, 4
          %s279 = int_to_ptr.vmem [resolvable:$true] %s278
          %284 = dma.vmem_to_hbm [thread:$0]  %s279, 128, %s277, %s264, 32, 32, 2
        $region40: #{tpu_custom_call.1} parent=27 // pred_fallthru
          _
      $region28: #{tpu_custom_call.1} parent=5 // pred_fallthru
        _
      %p285 = scmp.le.s32.totalorder 2, %s17
      // Predicated region
      $region41: #{tpu_custom_call.1} parent=5 // pred_check
        %p286 = pneg %p285
      $region42: #{tpu_custom_call.1} parent=5 // pred_check_branch
        %288 = sbr.rel (%p286) target = $region44
      $region43: #{tpu_custom_call.1} parent=5 // pred_region
        %s289 = ssub.s32 %s17, 2
        // Predicated region
        $region45: #{tpu_custom_call.1} parent=43 // pred_check
          %p290 = pneg %p114
        $region46: #{tpu_custom_call.1} parent=43 // pred_check_branch
          %292 = sbr.rel (%p290) target = $region48
        $region47: #{tpu_custom_call.1} parent=43 // pred_region
          %s293 = sand.u32 %s99, 1
          %s294 = scalar_lea.sflag [#allocation4], %s293
          %s295 = sand.u32 %s99, 1
          %s296 = smul.addr %s295, 8
          %s297 = scalar_lea.vmem [#allocation7], %s296
          %298 = dma.done %s294, 128
        $region48: #{tpu_custom_call.1} parent=43 // pred_fallthru
          _
      $region44: #{tpu_custom_call.1} parent=5 // pred_fallthru
        _
    $region6: #{tpu_custom_call.1} parent=1 // loop_footer
      %s21 = sadd.s32 1, %s17
    $region7: #{tpu_custom_call.1} parent=1 // loop_footer_branch
      %16 = sbr.rel target = $region3
    $region8: #{tpu_custom_call.1} parent=1 // loop_exit
      _
    %299 = vsyncpa [#allocation3], 1
    %s300 = scalar_lea.sflag [#allocation3], 1
    %301 = vsyncpa %s300, 1
    %302 = vsyncpa [#allocation6], 1
    %s303 = scalar_lea.sflag [#allocation6], 1
    %304 = vsyncpa %s303, 1
    %305 = vsyncpa [#allocation4], 1
    %s306 = scalar_lea.sflag [#allocation4], 1
    %307 = vsyncpa %s306, 1

</llo_original>
